<compile_context>
chip_gen: v6e
topology: v6e:2x2x1
jax: 0.10.0
libtpu: 0.0.40
codegen_flags: <defaults>
</compile_context>

<pallas_src>
import jax
import jax.numpy as jnp
from jax.experimental import pallas as pl
from jax.experimental.pallas import tpu as pltpu

_F = 20        # input features
_G = 32        # samples packed per reshaped row; 32*20 = 640 = 5*128 (lane-dense)


def _round_up(n, m):
    return ((n + m - 1) // m) * m


def _fused_kernel(x_ref, w_ref, b_ref, o_ref):
    # x_ref: (tm, 640) VMEM  -- tm rows of the (B/32, 640) view == 32*tm samples
    # w_ref: (640, 32) VMEM  -- block-diagonal kron(I_32, w_c); VMEM-resident (const map)
    # b_ref: (1, 1)    SMEM  -- composite bias, scalar read
    # o_ref: (tm, 32)  VMEM
    y = jnp.dot(x_ref[...], w_ref[...], preferred_element_type=jnp.float32)  # MXU
    y = y + b_ref[0, 0]
    # F.sigmoid; F.relu(sigmoid(.)) == sigmoid(.) on (0,1), so the relu is omitted.
    o_ref[...] = jax.nn.sigmoid(y)


def _fold_params(params):
    """Collapse the activation-free fc1*fc2*fc3 chain into one (20,1) affine map."""
    w1, b1 = params["w1"], params["b1"]
    w2, b2 = params["w2"], params["b2"]
    w3, b3 = params["w3"], params["b3"]
    w_c = w1 @ w2 @ w3                        # (20, 1)
    b_c = b1 @ w2 @ w3 + b2 @ w3 + b3         # (1, 1)
    return w_c, b_c


def _pick_tile(m_rows, max_tile_samples):
    """Rows of the (M, 640) view per grid step."""
    cap = max(1, max_tile_samples // _G)       # 32768 samples -> 1024 rows by default
    if m_rows <= 8:
        return m_rows                          # single block, dims == full array dims
    # >=4 grid steps when possible so both v7x TensorCores get work; keep sublane-mult-of-8.
    tm = min(cap, max(8, _round_up(pl.cdiv(m_rows, 4), 8)))
    return min(tm, _round_up(m_rows, 8))


def net_forward(x, params, *, max_tile_samples=32768):
    """x: (B, 20) float32 -> (B, 1) float32.

    max_tile_samples: batch per grid step.  32768 is DMA-dominated on v5e/v6e; on v7x
    65536-131072 is fine too (per-input buffer only 2.5 MiB at the default) as long as
    the grid keeps >=2 steps, which _pick_tile enforces.
    """
    B, F = x.shape
    assert F == _F, F
    w_c, b_c = _fold_params(params)            # tiny; done by XLA outside the kernel
    m_rows = B // _G
    rem = B - m_rows * _G
    parts = []

    if m_rows > 0:
        # Lane-dense view: a pure bitcast when B % 32 == 0 (zero HBM traffic).  When the
        # batch is ragged the main-part slice may cost one pass; prefer batch % 32 == 0.
        x_main = x if rem == 0 else x[: m_rows * _G]
        x2 = x_main.reshape(m_rows, _G * _F)                       # (M, 640)
        w_big = jnp.kron(jnp.eye(_G, dtype=jnp.float32), w_c)      # (640, 32) block-diag

        tm = _pick_tile(m_rows, max_tile_samples)
        grid = (pl.cdiv(m_rows, tm),)           # last block clipped by Pallas; no jnp.pad

        out2 = pl.pallas_call(
            _fused_kernel,
            out_shape=jax.ShapeDtypeStruct((m_rows, _G), jnp.float32),
            grid=grid,
            in_specs=[
                pl.BlockSpec((tm, _G * _F), lambda i: (i, 0)),     # batch-tiled, pipelined
                pl.BlockSpec((_G * _F, _G), lambda i: (0, 0)),     # weight: VMEM-resident
                pl.BlockSpec(memory_space=pltpu.MemorySpace.SMEM),  # bias: SMEM scalar
            ],
            out_specs=pl.BlockSpec((tm, _G), lambda i: (i, 0)),    # lane-dense output
            compiler_params=pltpu.CompilerParams(
                dimension_semantics=("parallel",)),                # shard tiles across TCs
        )(x2, w_big, b_c)
        parts.append(out2.reshape(m_rows * _G, 1))                 # bitcast back to (Bm,1)

    if rem > 0:
        # < 32 leftover samples: negligible plain-JAX epilogue.
        x_tail = x[m_rows * _G:]
        parts.append(jax.nn.sigmoid(x_tail @ w_c + b_c))

    return parts[0] if len(parts) == 1 else jnp.concatenate(parts, axis=0)


def init_params(key):
    """Deterministic synthetic init matching nn.Linear shapes.

    PyTorch stores W as (out, in); we store the transpose (in, out) so the math is
    x @ W (+ b), identical to PyTorch's x @ W.T + b.
    """
    def linear(key, fan_in, fan_out):
        kw, kb = jax.random.split(key)
        bound = 1.0 / jnp.sqrt(fan_in)          # same scale as PyTorch default init
        w = jax.random.uniform(kw, (fan_in, fan_out), jnp.float32, -bound, bound)
        b = jax.random.uniform(kb, (1, fan_out), jnp.float32, -bound, bound)
        return w, b

    k1, k2, k3 = jax.random.split(key, 3)
    w1, b1 = linear(k1, 20, 16)
    w2, b2 = linear(k2, 16, 8)
    w3, b3 = linear(k3, 8, 1)
    return {"w1": w1, "b1": b1, "w2": w2, "b2": b2, "w3": w3, "b3": b3}


def _reference(x, p):
    """Plain-JAX reference of the original (un-fused) PyTorch forward."""
    h = x @ p["w1"] + p["b1"]
    h = h @ p["w2"] + p["b2"]
    h = h @ p["w3"] + p["b3"]
    return jnp.maximum(jax.nn.sigmoid(h), 0.0)


if __name__ == "__main__":
    key = jax.random.PRNGKey(0)
    kx, kp = jax.random.split(key)
    params = init_params(kp)

    fwd = jax.jit(net_forward)

    # B=256: small spec-consistent batch (single block, zero-copy reshape path).
    # B=4103: multi-tile grid (4 clipped-pipelined steps) + ragged-tail path.
    for B in (256, 4103):
        x = jax.random.normal(jax.random.fold_in(kx, B), (B, _F), dtype=jnp.float32)
        out = jax.block_until_ready(fwd(x, params))
        ref = _reference(x, params)
        assert out.shape == (B, 1), out.shape
        assert jnp.allclose(out, ref, atol=1e-5, rtol=1e-5), "mismatch vs reference"

    print("KERNEL_OK")
</pallas_src>

<mosaic_0001>
module attributes {stable_mosaic.version = 11 : i64} {
  func.func @_fused_kernel(%arg0: i32, %arg1: memref<8x640xf32, #tpu.memory_space<vmem>>, %arg2: memref<640x32xf32, #tpu.memory_space<vmem>>, %arg3: memref<1x1xf32, #tpu.memory_space<smem>>, %arg4: memref<8x32xf32, #tpu.memory_space<vmem>>) attributes {dimension_semantics = [#tpu.dimension_semantics<parallel>], iteration_bounds = array<i64: 1>, scalar_prefetch = 0 : i64, scratch_operands = 0 : i64, tpu.core_type = #tpu.core_type<tc>, window_params = [{transform_indices = @transform_0, window_bounds = array<i64: 8, 640>}, {pipeline_mode = #tpu.pipeline_mode<synchronous>, transform_indices = @transform_1, window_bounds = array<i64: 640, 32>}, {transform_indices = @transform_2, window_bounds = array<i64: 1, 1>}, {transform_indices = @transform_3, window_bounds = array<i64: 8, 32>}]} {
    %c0 = arith.constant 0 : index
    %c0_0 = arith.constant 0 : index
    %0 = vector.load %arg1[%c0, %c0_0] : memref<8x640xf32, #tpu.memory_space<vmem>>, vector<8x640xf32>
    %c0_1 = arith.constant 0 : index
    %c0_2 = arith.constant 0 : index
    %1 = vector.load %arg2[%c0_1, %c0_2] : memref<640x32xf32, #tpu.memory_space<vmem>>, vector<640x32xf32>
    %cst = arith.constant dense<0.000000e+00> : vector<8x32xf32>
    %2 = tpu.matmul %0, %1, %cst {dimension_numbers = #tpu.dot_dimension_numbers<[1], [0], [0], [1], [0, 0, 1, 1], [], []>} : vector<8x640xf32>, vector<640x32xf32>, vector<8x32xf32> -> vector<8x32xf32>
    %c0_3 = arith.constant 0 : index
    %c0_4 = arith.constant 0 : index
    %3 = memref.load %arg3[%c0_3, %c0_4] : memref<1x1xf32, #tpu.memory_space<smem>>
    %4 = vector.broadcast %3 : f32 to vector<8x32xf32>
    %5 = arith.addf %2, %4 : vector<8x32xf32>
    %6 = arith.negf %5 : vector<8x32xf32>
    %7 = math.exp %6 : vector<8x32xf32>
    %cst_5 = arith.constant 1.000000e+00 : f32
    %8 = vector.broadcast %cst_5 : f32 to vector<8x32xf32>
    %9 = arith.addf %8, %7 : vector<8x32xf32>
    %10 = arith.divf %8, %9 : vector<8x32xf32>
    %c0_6 = arith.constant 0 : index
    %c0_7 = arith.constant 0 : index
    %11 = vector.load %arg4[%c0_6, %c0_7] : memref<8x32xf32, #tpu.memory_space<vmem>>, vector<8x32xf32>
    tpu.vector_store %arg4[%c0_6, %c0_7], %10 {strides = array<i32>} : memref<8x32xf32, #tpu.memory_space<vmem>>, vector<8x32xf32>,
    return
  }
  func.func @transform_0(%arg0: i32) -> (i32, i32) {
    %c0_i32 = arith.constant 0 : i32
    %c0_i32_0 = arith.constant 0 : i32
    return %arg0, %c0_i32 : i32, i32
  }
  func.func @transform_1(%arg0: i32) -> (i32, i32) {
    %c0_i32 = arith.constant 0 : i32
    %c0_i32_0 = arith.constant 0 : i32
    %c0_i32_1 = arith.constant 0 : i32
    return %c0_i32, %c0_i32_0 : i32, i32
  }
  func.func @transform_2(%arg0: i32) -> (i32, i32) {
    %c0_i32 = arith.constant 0 : i32
    %c0_i32_0 = arith.constant 0 : i32
    %c0_i32_1 = arith.constant 0 : i32
    return %c0_i32, %c0_i32_0 : i32, i32
  }
  func.func @transform_3(%arg0: i32) -> (i32, i32) {
    %c0_i32 = arith.constant 0 : i32
    %c0_i32_0 = arith.constant 0 : i32
    return %arg0, %c0_i32 : i32, i32
  }
}

</mosaic_0001>

<llo_original>
// kernel: net_forward.1
$region0: #{net_forward.1}
  #allocation0 [shape = 'u32[]', space=smem, size = 0x4, offset = 0x4, fixed_abs, tag = 'smem constant byte address 0x4 - core index']
  #allocation1 [shape = 'u32[144,128]{1,0:T(1,128)}', space=vmem, size = 0x12000, scoped, tag = 'internal scratch']
  #allocation2 [shape = 'f32[1,1]{1,0:T(1,128)S(6)}', space=smem, size = 0x200, scoped, tag = 'scoped memory for net_forward.1']
  %s0 = inlined_call_operand.vmem [shape: f32[8,640], index: 0, kind: input, shape index: {}]
  %s1 = inlined_call_operand.vmem [shape: f32[640,32], index: 1, kind: input, shape index: {}]
  %s2 = inlined_call_operand.<no memory space> [shape: f32[1,1], index: 2, kind: input, shape index: {}]
  %s3 = inlined_call_operand.vmem [shape: f32[8,32], index: 3, kind: output, shape index: {}]
  %s4 = sld [smem:[#allocation0]]
  $region22: #{net_forward.1} parent=0
    _
  %s6 = ssub.s32 1, %s4
  %s7 = scalar_select 0, %s6, %s4
  %8 = sst [smem:[#allocation2]] %s2
  // Predicated region
  $region2: #{net_forward.1} parent=0 // pred_check
    _
  $region3: #{net_forward.1} parent=0 // pred_check_branch
    %10 = sbr.rel (0) target = $region5
  $region4: #{net_forward.1} parent=0 // pred_region
    _
  $region5: #{net_forward.1} parent=0 // pred_fallthru
    _
  // Predicated region
  $region6: #{net_forward.1} parent=0 // pred_check
    _
  $region7: #{net_forward.1} parent=0 // pred_check_branch
    %12 = sbr.rel (0) target = $region9
  $region8: #{net_forward.1} parent=0 // pred_region
    _
  $region9: #{net_forward.1} parent=0 // pred_fallthru
    _
  // Predicated region
  $region10: #{net_forward.1} parent=0 // pred_check
    _
  $region11: #{net_forward.1} parent=0 // pred_check_branch
    %14 = sbr.rel (0) target = $region13
  $region12: #{net_forward.1} parent=0 // pred_region
    _
  $region13: #{net_forward.1} parent=0 // pred_fallthru
    _
  %v15 = vld [vmem:[%s0] sm:$0xff]
  %v16 = vld [vmem:[%s0 + $0x8] sm:$0xff]
  %v17 = vld [vmem:[%s0 + $0x10] sm:$0xff]
  %v18 = vld [vmem:[%s0 + $0x18] sm:$0xff]
  %v19 = vld [vmem:[%s0 + $0x20] sm:$0xff]
  %v20 = vld [vmem:[%s1] sm:$0xff]
  %v21 = vld [vmem:[%s1 + $0x8] sm:$0xff]
  %v22 = vld [vmem:[%s1 + $0x10] sm:$0xff]
  %v23 = vld [vmem:[%s1 + $0x18] sm:$0xff]
  %v24 = vld [vmem:[%s1 + $0x20] sm:$0xff]
  %v25 = vld [vmem:[%s1 + $0x28] sm:$0xff]
  %v26 = vld [vmem:[%s1 + $0x30] sm:$0xff]
  %v27 = vld [vmem:[%s1 + $0x38] sm:$0xff]
  %v28 = vld [vmem:[%s1 + $0x40] sm:$0xff]
  %v29 = vld [vmem:[%s1 + $0x48] sm:$0xff]
  %v30 = vld [vmem:[%s1 + $0x50] sm:$0xff]
  %v31 = vld [vmem:[%s1 + $0x58] sm:$0xff]
  %v32 = vld [vmem:[%s1 + $0x60] sm:$0xff]
  %v33 = vld [vmem:[%s1 + $0x68] sm:$0xff]
  %v34 = vld [vmem:[%s1 + $0x70] sm:$0xff]
  %v35 = vld [vmem:[%s1 + $0x78] sm:$0xff]
  %v36 = vld [vmem:[%s1 + $0x80] sm:$0xff]
  %v37 = vld [vmem:[%s1 + $0x88] sm:$0xff]
  %v38 = vld [vmem:[%s1 + $0x90] sm:$0xff]
  %v39 = vld [vmem:[%s1 + $0x98] sm:$0xff]
  %v40 = vld [vmem:[%s1 + $0xa0] sm:$0xff]
  %v41 = vld [vmem:[%s1 + $0xa8] sm:$0xff]
  %v42 = vld [vmem:[%s1 + $0xb0] sm:$0xff]
  %v43 = vld [vmem:[%s1 + $0xb8] sm:$0xff]
  %v44 = vld [vmem:[%s1 + $0xc0] sm:$0xff]
  %v45 = vld [vmem:[%s1 + $0xc8] sm:$0xff]
  %v46 = vld [vmem:[%s1 + $0xd0] sm:$0xff]
  %v47 = vld [vmem:[%s1 + $0xd8] sm:$0xff]
  %v48 = vld [vmem:[%s1 + $0xe0] sm:$0xff]
  %v49 = vld [vmem:[%s1 + $0xe8] sm:$0xff]
  %v50 = vld [vmem:[%s1 + $0xf0] sm:$0xff]
  %v51 = vld [vmem:[%s1 + $0xf8] sm:$0xff]
  %v52 = vld [vmem:[%s1 + $0x100] sm:$0xff]
  %v53 = vld [vmem:[%s1 + $0x108] sm:$0xff]
  %v54 = vld [vmem:[%s1 + $0x110] sm:$0xff]
  %v55 = vld [vmem:[%s1 + $0x118] sm:$0xff]
  %v56 = vld [vmem:[%s1 + $0x120] sm:$0xff]
  %v57 = vld [vmem:[%s1 + $0x128] sm:$0xff]
  %v58 = vld [vmem:[%s1 + $0x130] sm:$0xff]
  %v59 = vld [vmem:[%s1 + $0x138] sm:$0xff]
  %v60 = vld [vmem:[%s1 + $0x140] sm:$0xff]
  %v61 = vld [vmem:[%s1 + $0x148] sm:$0xff]
  %v62 = vld [vmem:[%s1 + $0x150] sm:$0xff]
  %v63 = vld [vmem:[%s1 + $0x158] sm:$0xff]
  %v64 = vld [vmem:[%s1 + $0x160] sm:$0xff]
  %v65 = vld [vmem:[%s1 + $0x168] sm:$0xff]
  %v66 = vld [vmem:[%s1 + $0x170] sm:$0xff]
  %v67 = vld [vmem:[%s1 + $0x178] sm:$0xff]
  %v68 = vld [vmem:[%s1 + $0x180] sm:$0xff]
  %v69 = vld [vmem:[%s1 + $0x188] sm:$0xff]
  %v70 = vld [vmem:[%s1 + $0x190] sm:$0xff]
  %v71 = vld [vmem:[%s1 + $0x198] sm:$0xff]
  %v72 = vld [vmem:[%s1 + $0x1a0] sm:$0xff]
  %v73 = vld [vmem:[%s1 + $0x1a8] sm:$0xff]
  %v74 = vld [vmem:[%s1 + $0x1b0] sm:$0xff]
  %v75 = vld [vmem:[%s1 + $0x1b8] sm:$0xff]
  %v76 = vld [vmem:[%s1 + $0x1c0] sm:$0xff]
  %v77 = vld [vmem:[%s1 + $0x1c8] sm:$0xff]
  %v78 = vld [vmem:[%s1 + $0x1d0] sm:$0xff]
  %v79 = vld [vmem:[%s1 + $0x1d8] sm:$0xff]
  %v80 = vld [vmem:[%s1 + $0x1e0] sm:$0xff]
  %v81 = vld [vmem:[%s1 + $0x1e8] sm:$0xff]
  %v82 = vld [vmem:[%s1 + $0x1f0] sm:$0xff]
  %v83 = vld [vmem:[%s1 + $0x1f8] sm:$0xff]
  %v84 = vld [vmem:[%s1 + $0x200] sm:$0xff]
  %v85 = vld [vmem:[%s1 + $0x208] sm:$0xff]
  %v86 = vld [vmem:[%s1 + $0x210] sm:$0xff]
  %v87 = vld [vmem:[%s1 + $0x218] sm:$0xff]
  %v88 = vld [vmem:[%s1 + $0x220] sm:$0xff]
  %v89 = vld [vmem:[%s1 + $0x228] sm:$0xff]
  %v90 = vld [vmem:[%s1 + $0x230] sm:$0xff]
  %v91 = vld [vmem:[%s1 + $0x238] sm:$0xff]
  %v92 = vld [vmem:[%s1 + $0x240] sm:$0xff]
  %v93 = vld [vmem:[%s1 + $0x248] sm:$0xff]
  %v94 = vld [vmem:[%s1 + $0x250] sm:$0xff]
  %v95 = vld [vmem:[%s1 + $0x258] sm:$0xff]
  %v96 = vld [vmem:[%s1 + $0x260] sm:$0xff]
  %v97 = vld [vmem:[%s1 + $0x268] sm:$0xff]
  %v98 = vld [vmem:[%s1 + $0x270] sm:$0xff]
  %v99 = vld [vmem:[%s1 + $0x278] sm:$0xff]
  %s100 = sld [smem:[#allocation2]]
  %v101 = vstv %s100
  %102 = vmatprep.subr.mxu0 0.0
  %103 = vmatpush1.msra.mxu0 %v35
  %104 = vmatprep.subr.mxu0 0.0
  %105 = vmatpush1.msra.mxu0 %v34
  %106 = vmatprep.subr.mxu0 0.0
  %107 = vmatpush1.msra.mxu0 %v33
  %108 = vmatprep.subr.mxu0 0.0
  %109 = vmatpush1.msra.mxu0 %v32
  %110 = vmatprep.subr.mxu0 0.0
  %111 = vmatpush1.msra.mxu0 %v31
  %112 = vmatprep.subr.mxu0 0.0
  %113 = vmatpush1.msra.mxu0 %v30
  %114 = vmatprep.subr.mxu0 0.0
  %115 = vmatpush1.msra.mxu0 %v29
  %116 = vmatprep.subr.mxu0 0.0
  %117 = vmatpush1.msra.mxu0 %v28
  %118 = vmatprep.subr.mxu0 0.0
  %119 = vmatpush1.msra.mxu0 %v27
  %120 = vmatprep.subr.mxu0 0.0
  %121 = vmatpush1.msra.mxu0 %v26
  %122 = vmatprep.subr.mxu0 0.0
  %123 = vmatpush1.msra.mxu0 %v25
  %124 = vmatprep.subr.mxu0 0.0
  %125 = vmatpush1.msra.mxu0 %v24
  %126 = vmatprep.subr.mxu0 0.0
  %127 = vmatpush1.msra.mxu0 %v23
  %128 = vmatprep.subr.mxu0 0.0
  %129 = vmatpush1.msra.mxu0 %v22
  %130 = vmatprep.subr.mxu0 0.0
  %131 = vmatpush1.msra.mxu0 %v21
  %132 = vmatprep.subr.mxu0 0.0
  %133 = vmatpush1.msra.mxu0 %v20
  %134 = vmatprep.subr.mxu0 0.0
  %135 = vmatpush2.msra.mxu0 %v51
  %136 = vmatprep.subr.mxu0 0.0
  %137 = vmatpush2.msra.mxu0 %v50
  %138 = vmatprep.subr.mxu0 0.0
  %139 = vmatpush2.msra.mxu0 %v49
  %140 = vmatprep.subr.mxu0 0.0
  %141 = vmatpush2.msra.mxu0 %v48
  %142 = vmatprep.subr.mxu0 0.0
  %143 = vmatpush2.msra.mxu0 %v47
  %144 = vmatprep.subr.mxu0 0.0
  %145 = vmatpush2.msra.mxu0 %v46
  %146 = vmatprep.subr.mxu0 0.0
  %147 = vmatpush2.msra.mxu0 %v45
  %148 = vmatprep.subr.mxu0 0.0
  %149 = vmatpush2.msra.mxu0 %v44
  %150 = vmatprep.subr.mxu0 0.0
  %151 = vmatpush2.msra.mxu0 %v43
  %152 = vmatprep.subr.mxu0 0.0
  %153 = vmatpush2.msra.mxu0 %v42
  %154 = vmatprep.subr.mxu0 0.0
  %155 = vmatpush2.msra.mxu0 %v41
  %156 = vmatprep.subr.mxu0 0.0
  %157 = vmatpush2.msra.mxu0 %v40
  %158 = vmatprep.subr.mxu0 0.0
  %159 = vmatpush2.msra.mxu0 %v39
  %160 = vmatprep.subr.mxu0 0.0
  %161 = vmatpush2.msra.mxu0 %v38
  %162 = vmatprep.subr.mxu0 0.0
  %163 = vmatpush2.msra.mxu0 %v37
  %164 = vmatprep.subr.mxu0 0.0
  %165 = vmatpush2.msra.mxu0 %v36
  %166 = vmatprep.mubr.f32.mxu0 %v16
  %167 = vmatmul.mubr.f32.gmra.mxu0 %v15
  %v168 = vpop.f32.mrf.mxu0
  %v169 = vadd.f32 %v101, %v168
  %v170 = vpop.f32.mrf.mxu0
  %171 = vdwg.mxu0
  %172 = vmatprep.subr.mxu0 0.0
  %173 = vmatpush1.msra.mxu0 %v67
  %174 = vmatprep.subr.mxu0 0.0
  %175 = vmatpush1.msra.mxu0 %v66
  %176 = vmatprep.subr.mxu0 0.0
  %177 = vmatpush1.msra.mxu0 %v65
  %178 = vmatprep.subr.mxu0 0.0
  %179 = vmatpush1.msra.mxu0 %v64
  %180 = vmatprep.subr.mxu0 0.0
  %181 = vmatpush1.msra.mxu0 %v63
  %182 = vmatprep.subr.mxu0 0.0
  %183 = vmatpush1.msra.mxu0 %v62
  %184 = vmatprep.subr.mxu0 0.0
  %185 = vmatpush1.msra.mxu0 %v61
  %186 = vmatprep.subr.mxu0 0.0
  %187 = vmatpush1.msra.mxu0 %v60
  %188 = vmatprep.subr.mxu0 0.0
  %189 = vmatpush1.msra.mxu0 %v59
  %190 = vmatprep.subr.mxu0 0.0
  %191 = vmatpush1.msra.mxu0 %v58
  %192 = vmatprep.subr.mxu0 0.0
  %193 = vmatpush1.msra.mxu0 %v57
  %194 = vmatprep.subr.mxu0 0.0
  %195 = vmatpush1.msra.mxu0 %v56
  %196 = vmatprep.subr.mxu0 0.0
  %197 = vmatpush1.msra.mxu0 %v55
  %198 = vmatprep.subr.mxu0 0.0
  %199 = vmatpush1.msra.mxu0 %v54
  %200 = vmatprep.subr.mxu0 0.0
  %201 = vmatpush1.msra.mxu0 %v53
  %202 = vmatprep.subr.mxu0 0.0
  %203 = vmatpush1.msra.mxu0 %v52
  %204 = vmatprep.subr.mxu0 0.0
  %205 = vmatpush2.msra.mxu0 %v83
  %206 = vmatprep.subr.mxu0 0.0
  %207 = vmatpush2.msra.mxu0 %v82
  %208 = vmatprep.subr.mxu0 0.0
  %209 = vmatpush2.msra.mxu0 %v81
  %210 = vmatprep.subr.mxu0 0.0
  %211 = vmatpush2.msra.mxu0 %v80
  %212 = vmatprep.subr.mxu0 0.0
  %213 = vmatpush2.msra.mxu0 %v79
  %214 = vmatprep.subr.mxu0 0.0
  %215 = vmatpush2.msra.mxu0 %v78
  %216 = vmatprep.subr.mxu0 0.0
  %217 = vmatpush2.msra.mxu0 %v77
  %218 = vmatprep.subr.mxu0 0.0
  %219 = vmatpush2.msra.mxu0 %v76
  %220 = vmatprep.subr.mxu0 0.0
  %221 = vmatpush2.msra.mxu0 %v75
  %222 = vmatprep.subr.mxu0 0.0
  %223 = vmatpush2.msra.mxu0 %v74
  %224 = vmatprep.subr.mxu0 0.0
  %225 = vmatpush2.msra.mxu0 %v73
  %226 = vmatprep.subr.mxu0 0.0
  %227 = vmatpush2.msra.mxu0 %v72
  %228 = vmatprep.subr.mxu0 0.0
  %229 = vmatpush2.msra.mxu0 %v71
  %230 = vmatprep.subr.mxu0 0.0
  %231 = vmatpush2.msra.mxu0 %v70
  %232 = vmatprep.subr.mxu0 0.0
  %233 = vmatpush2.msra.mxu0 %v69
  %234 = vmatprep.subr.mxu0 0.0
  %235 = vmatpush2.msra.mxu0 %v68
  %236 = vmatprep.mubr.f32.mxu0 %v18
  %237 = vmatmul.mubr.f32.gmra.mxu0 %v17
  %v238 = vpop.f32.mrf.mxu0
  %v239 = vadd.f32 %v169, %v238
  %v240 = vpop.f32.mrf.mxu0
  %241 = vdwg.mxu0
  %242 = vmatprep.subr.mxu0 0.0
  %243 = vmatpush1.msra.mxu0 %v99
  %244 = vmatprep.subr.mxu0 0.0
  %245 = vmatpush1.msra.mxu0 %v98
  %246 = vmatprep.subr.mxu0 0.0
  %247 = vmatpush1.msra.mxu0 %v97
  %248 = vmatprep.subr.mxu0 0.0
  %249 = vmatpush1.msra.mxu0 %v96
  %250 = vmatprep.subr.mxu0 0.0
  %251 = vmatpush1.msra.mxu0 %v95
  %252 = vmatprep.subr.mxu0 0.0
  %253 = vmatpush1.msra.mxu0 %v94
  %254 = vmatprep.subr.mxu0 0.0
  %255 = vmatpush1.msra.mxu0 %v93
  %256 = vmatprep.subr.mxu0 0.0
  %257 = vmatpush1.msra.mxu0 %v92
  %258 = vmatprep.subr.mxu0 0.0
  %259 = vmatpush1.msra.mxu0 %v91
  %260 = vmatprep.subr.mxu0 0.0
  %261 = vmatpush1.msra.mxu0 %v90
  %262 = vmatprep.subr.mxu0 0.0
  %263 = vmatpush1.msra.mxu0 %v89
  %264 = vmatprep.subr.mxu0 0.0
  %265 = vmatpush1.msra.mxu0 %v88
  %266 = vmatprep.subr.mxu0 0.0
  %267 = vmatpush1.msra.mxu0 %v87
  %268 = vmatprep.subr.mxu0 0.0
  %269 = vmatpush1.msra.mxu0 %v86
  %270 = vmatprep.subr.mxu0 0.0
  %271 = vmatpush1.msra.mxu0 %v85
  %272 = vmatprep.subr.mxu0 0.0
  %273 = vmatpush1.msra.mxu0 %v84
  %274 = vmatprep.subr.mxu0 0.0
  %275 = vmatpush2.msra.mxu0 0.0
  %276 = vmatprep.subr.mxu0 0.0
  %277 = vmatpush2.msra.mxu0 0.0
  %278 = vmatprep.subr.mxu0 0.0
  %279 = vmatpush2.msra.mxu0 0.0
  %280 = vmatprep.subr.mxu0 0.0
  %281 = vmatpush2.msra.mxu0 0.0
  %282 = vmatprep.subr.mxu0 0.0
  %283 = vmatpush2.msra.mxu0 0.0
  %284 = vmatprep.subr.mxu0 0.0
  %285 = vmatpush2.msra.mxu0 0.0
  %286 = vmatprep.subr.mxu0 0.0
  %287 = vmatpush2.msra.mxu0 0.0
  %288 = vmatprep.subr.mxu0 0.0
  %289 = vmatpush2.msra.mxu0 0.0
  %290 = vmatprep.subr.mxu0 0.0
  %291 = vmatpush2.msra.mxu0 0.0
  %292 = vmatprep.subr.mxu0 0.0
  %293 = vmatpush2.msra.mxu0 0.0
  %294 = vmatprep.subr.mxu0 0.0
  %295 = vmatpush2.msra.mxu0 0.0
  %296 = vmatprep.subr.mxu0 0.0
  %297 = vmatpush2.msra.mxu0 0.0
  %298 = vmatprep.subr.mxu0 0.0
  %299 = vmatpush2.msra.mxu0 0.0
  %300 = vmatprep.subr.mxu0 0.0
  %301 = vmatpush2.msra.mxu0 0.0
  %302 = vmatprep.subr.mxu0 0.0
  %303 = vmatpush2.msra.mxu0 0.0
  %304 = vmatprep.subr.mxu0 0.0
  %305 = vmatpush2.msra.mxu0 0.0
  %306 = vmatprep.mubr.f32.mxu0 0.0
  %307 = vmatmul.mubr.f32.gmra.mxu0 %v19
  %v308 = vpop.f32.mrf.mxu0
  %v309 = vadd.f32 %v239, %v308
  %v310 = vpop.f32.mrf.mxu0
  %311 = vdwg.mxu0
  %v312 = vxor.u32 %v309, 2147483648
  %v313 = vmul.f32 %v312, 1.442695
  %v314 = vpow.pop %v313
  %v315 = vadd.f32 %v314, 1.0
  %v316 = vrcp.pop %v315
  %v317 = vmul.f32 1.0, %v316
  %vm318 = vcmask 261120
  %319 = vst.msk [vmem:[%s3] sm:$0xff] %vm318, %v317
  // Predicated region
  $region14: #{net_forward.1} parent=0 // pred_check
    _
  $region15: #{net_forward.1} parent=0 // pred_check_branch
    %321 = sbr.rel (0) target = $region17
  $region16: #{net_forward.1} parent=0 // pred_region
    _
  $region17: #{net_forward.1} parent=0 // pred_fallthru
    _
  // Predicated region
  $region18: #{net_forward.1} parent=0 // pred_check
    _
  $region19: #{net_forward.1} parent=0 // pred_check_branch
    %323 = sbr.rel (0) target = $region21
  $region20: #{net_forward.1} parent=0 // pred_region
    _
  $region21: #{net_forward.1} parent=0 // pred_fallthru
    _

</llo_original>
